<compile_context>
chip_gen: v5e
topology: v5e:2x2
jax: 0.10.0
libtpu: 0.0.40
codegen_flags: <defaults>
</compile_context>

<pallas_src>
import functools

import jax
import jax.numpy as jnp
from jax.experimental import pallas as pl
from jax.experimental.pallas import tpu as pltpu

_SUBLANE = 8


def _round_up(x: int, m: int) -> int:
    return ((x + m - 1) // m) * m


def _num_tensorcores() -> int:
    # v7x has 2 TensorCores per chip; v5e/v6e have 1.  Fall back to 1 if the
    # query is unavailable so we never shrink tiles without a parallelism gain.
    try:
        info = pltpu.get_tpu_info()
        for attr in ("num_cores", "core_count", "num_tensorcores",
                     "tensorcore_count"):
            n = getattr(info, attr, None)
            if n is not None:
                n = int(n)
                if n > 0:
                    return n
    except Exception:
        pass
    return 1


def _gate_kernel(x_ref, w_ref, b_ref, o_ref, *, inv_t, d_output):
    # x_ref : (tm, d_in)    input tile
    # w_ref : (d_in, d_out) full weight, grid-invariant
    # b_ref : (1, d_out)    bias, grid-invariant
    # o_ref : (tm, d_out)   output tile (true width, no lane padding)
    logits = jnp.dot(x_ref[...], w_ref[...], preferred_element_type=jnp.float32)
    logits = (logits + b_ref[...]) * inv_t          # divide by temperature beta
    # Numerically-stable softmax along the (real) lane axis.
    m = jnp.max(logits, axis=-1, keepdims=True)
    e = jnp.exp(logits - m)
    s = jnp.sum(e, axis=-1, keepdims=True)
    # approx=True would use a single EUP vrcp (free slot) but changes the
    # normalization at the last bit; keep exact for parity with the reference.
    inv = pl.reciprocal(s, approx=False)
    o_ref[...] = (e * (d_output * inv)).astype(o_ref.dtype)


def gate_forward(x, w, b, *, beta: float, d_output: int,
                 tm: int | None = None,
                 vmem_budget_bytes: int = 12 * 1024 * 1024):
    """Pallas Gate forward.

    x : (B, d_input)
    w : (d_input, d_output)  (transposed vs. torch.nn.Linear.weight)
    b : (1, d_output)
    """
    B, d_in = x.shape
    d_out = w.shape[1]

    itemsize = jnp.dtype(x.dtype).itemsize
    w_itemsize = jnp.dtype(w.dtype).itemsize
    # Sublane multiple for this dtype (f32 -> 8, bf16 -> 16, int8 -> 32).
    sub = _SUBLANE * max(1, 4 // max(itemsize, 1))

    # Grid-invariant parameters: single-buffer only when the weight is big
    # enough for the second buffer to matter (zero benefit at KiB scale).
    w_bytes = d_in * d_out * w_itemsize
    single_buffer_params = w_bytes > (1 << 20)
    n_param_buf = 1 if single_buffer_params else 2
    param_bytes = (d_in * d_out + d_out) * w_itemsize * n_param_buf

    if tm is None:
        # Double-buffered x tile + out tile per row, alongside resident params.
        row_bytes = 2 * (d_in + d_out) * max(itemsize, 4)
        avail = max(vmem_budget_bytes - param_bytes, row_bytes * sub)
        tm = min(2048, avail // row_bytes)
        ntc = _num_tensorcores()
        if ntc > 1 and B >= ntc * sub:
            # Only split when the chip really has multiple TensorCores (v7x).
            tm = min(tm, _round_up(pl.cdiv(B, ntc), sub))
        tm = min(tm, _round_up(B, sub))
    tm = max(sub, (int(tm) // sub) * sub)

    grid = pl.cdiv(B, tm)   # ragged last block: OOB rows dropped on writeback

    # Explicit VMEM accounting (safe on v7x's smaller VMEM).
    tile_bytes = 2 * tm * (d_in * itemsize + d_out * itemsize)
    footprint = param_bytes + tile_bytes
    vmem_limit = int(min(28 << 20, max(16 << 20, 2 * footprint + (2 << 20))))

    kernel = functools.partial(_gate_kernel,
                               inv_t=1.0 / float(beta),
                               d_output=float(d_output))

    if single_buffer_params:
        w_spec = pl.BlockSpec((d_in, d_out), lambda i: (0, 0),
                              pipeline_mode=pl.Buffered(1))
        b_spec = pl.BlockSpec((1, d_out), lambda i: (0, 0),
                              pipeline_mode=pl.Buffered(1))
    else:
        w_spec = pl.BlockSpec((d_in, d_out), lambda i: (0, 0))
        b_spec = pl.BlockSpec((1, d_out), lambda i: (0, 0))

    out = pl.pallas_call(
        kernel,
        out_shape=jax.ShapeDtypeStruct((B, d_out), x.dtype),
        grid_spec=pltpu.PrefetchScalarGridSpec(
            num_scalar_prefetch=0,
            grid=(grid,),
            in_specs=[
                pl.BlockSpec((tm, d_in), lambda i: (i, 0)),
                w_spec,
                b_spec,
            ],
            out_specs=pl.BlockSpec((tm, d_out), lambda i: (i, 0)),
        ),
        compiler_params=pltpu.CompilerParams(
            dimension_semantics=("parallel",),
            vmem_limit_bytes=vmem_limit),
    )(x, w, b)

    return out


def gate_reference(x, w, b, *, beta, d_output):
    logits = (x @ w + b) / beta
    return d_output * jax.nn.softmax(logits, axis=-1)


if __name__ == "__main__":
    # Module config (small, consistent with the forward): d_input=32, d_output=16
    d_input, d_output = 32, 16
    beta = 1.0

    key = jax.random.PRNGKey(0)
    k_x, k_w, k_b, k_x2 = jax.random.split(key, 4)

    # Deterministic parameter init, mimicking nn.Linear's U(-1/sqrt(fan_in), ...)
    bound = 1.0 / (d_input ** 0.5)
    w = jax.random.uniform(k_w, (d_input, d_output), jnp.float32, -bound, bound)
    b = jax.random.uniform(k_b, (1, d_output), jnp.float32, -bound, bound)

    # Small batch: single grid step, tm derived automatically.
    x_small = jax.random.normal(k_x, (8, d_input), jnp.float32)
    out_small = jax.block_until_ready(
        gate_forward(x_small, w, b, beta=beta, d_output=d_output))
    ref_small = gate_reference(x_small, w, b, beta=beta, d_output=d_output)
    assert out_small.shape == (8, d_output)
    assert jnp.allclose(out_small, ref_small, atol=1e-5, rtol=1e-5)

    # Larger batch that is NOT a multiple of the tile: exercises the ragged
    # last grid block (no wrapper pad/slice passes) and a multi-step grid.
    x_big = jax.random.normal(k_x2, (200, d_input), jnp.float32)
    out_big = jax.block_until_ready(
        gate_forward(x_big, w, b, beta=beta, d_output=d_output, tm=64))
    ref_big = gate_reference(x_big, w, b, beta=beta, d_output=d_output)
    assert out_big.shape == (200, d_output)
    assert jnp.allclose(out_big, ref_big, atol=1e-5, rtol=1e-5)

    print("KERNEL_OK")
</pallas_src>

<mosaic_0001>
module attributes {stable_mosaic.version = 11 : i64} {
  func.func @_gate_kernel(%arg0: i32, %arg1: memref<8x32xf32, #tpu.memory_space<vmem>>, %arg2: memref<32x16xf32, #tpu.memory_space<vmem>>, %arg3: memref<1x16xf32, #tpu.memory_space<vmem>>, %arg4: memref<8x16xf32, #tpu.memory_space<vmem>>) attributes {dimension_semantics = [#tpu.dimension_semantics<parallel>], iteration_bounds = array<i64: 1>, scalar_prefetch = 0 : i64, scratch_operands = 0 : i64, tpu.core_type = #tpu.core_type<tc>, window_params = [{transform_indices = @transform_0, window_bounds = array<i64: 8, 32>}, {pipeline_mode = #tpu.pipeline_mode<synchronous>, transform_indices = @transform_1, window_bounds = array<i64: 32, 16>}, {pipeline_mode = #tpu.pipeline_mode<synchronous>, transform_indices = @transform_2, window_bounds = array<i64: 1, 16>}, {transform_indices = @transform_3, window_bounds = array<i64: 8, 16>}]} {
    %c0 = arith.constant 0 : index
    %c0_0 = arith.constant 0 : index
    %0 = vector.load %arg1[%c0, %c0_0] : memref<8x32xf32, #tpu.memory_space<vmem>>, vector<8x32xf32>
    %c0_1 = arith.constant 0 : index
    %c0_2 = arith.constant 0 : index
    %1 = vector.load %arg2[%c0_1, %c0_2] : memref<32x16xf32, #tpu.memory_space<vmem>>, vector<32x16xf32>
    %cst = arith.constant dense<0.000000e+00> : vector<8x16xf32>
    %2 = tpu.matmul %0, %1, %cst {dimension_numbers = #tpu.dot_dimension_numbers<[1], [0], [0], [1], [0, 0, 1, 1], [], []>} : vector<8x32xf32>, vector<32x16xf32>, vector<8x16xf32> -> vector<8x16xf32>
    %c0_3 = arith.constant 0 : index
    %c0_4 = arith.constant 0 : index
    %3 = vector.load %arg3[%c0_3, %c0_4] : memref<1x16xf32, #tpu.memory_space<vmem>>, vector<1x16xf32>
    %4 = vector.broadcast %3 : vector<1x16xf32> to vector<8x16xf32>
    %5 = arith.addf %2, %4 : vector<8x16xf32>
    %cst_5 = arith.constant 1.000000e+00 : f32
    %6 = vector.broadcast %cst_5 : f32 to vector<8x16xf32>
    %7 = arith.mulf %5, %6 : vector<8x16xf32>
    %cst_6 = arith.constant dense<0xFF800000> : vector<8xf32>
    %8 = vector.multi_reduction <maximumf>, %7, %cst_6 [1] : vector<8x16xf32> to vector<8xf32>
    %9 = vector.shape_cast %8 : vector<8xf32> to vector<8x1xf32>
    %10 = vector.broadcast %9 : vector<8x1xf32> to vector<8x16xf32>
    %11 = arith.subf %7, %10 : vector<8x16xf32>
    %12 = math.exp %11 : vector<8x16xf32>
    %cst_7 = arith.constant dense<0.000000e+00> : vector<8xf32>
    %13 = vector.multi_reduction <add>, %12, %cst_7 [1] : vector<8x16xf32> to vector<8xf32>
    %14 = vector.shape_cast %13 : vector<8xf32> to vector<8x1xf32>
    %15 = tpu.reciprocal %14 : vector<8x1xf32> -> vector<8x1xf32>
    %cst_8 = arith.constant 1.600000e+01 : f32
    %16 = vector.broadcast %cst_8 : f32 to vector<8x1xf32>
    %17 = arith.mulf %16, %15 : vector<8x1xf32>
    %18 = vector.broadcast %17 : vector<8x1xf32> to vector<8x16xf32>
    %19 = arith.mulf %12, %18 : vector<8x16xf32>
    %c0_9 = arith.constant 0 : index
    %c0_10 = arith.constant 0 : index
    %20 = vector.load %arg4[%c0_9, %c0_10] : memref<8x16xf32, #tpu.memory_space<vmem>>, vector<8x16xf32>
    tpu.vector_store %arg4[%c0_9, %c0_10], %19 {strides = array<i32>} : memref<8x16xf32, #tpu.memory_space<vmem>>, vector<8x16xf32>,
    return
  }
  func.func @transform_0(%arg0: i32) -> (i32, i32) {
    %c0_i32 = arith.constant 0 : i32
    %c0_i32_0 = arith.constant 0 : i32
    return %arg0, %c0_i32 : i32, i32
  }
  func.func @transform_1(%arg0: i32) -> (i32, i32) {
    %c0_i32 = arith.constant 0 : i32
    %c0_i32_0 = arith.constant 0 : i32
    %c0_i32_1 = arith.constant 0 : i32
    return %c0_i32, %c0_i32_0 : i32, i32
  }
  func.func @transform_2(%arg0: i32) -> (i32, i32) {
    %c0_i32 = arith.constant 0 : i32
    %c0_i32_0 = arith.constant 0 : i32
    %c0_i32_1 = arith.constant 0 : i32
    return %c0_i32, %c0_i32_0 : i32, i32
  }
  func.func @transform_3(%arg0: i32) -> (i32, i32) {
    %c0_i32 = arith.constant 0 : i32
    %c0_i32_0 = arith.constant 0 : i32
    return %arg0, %c0_i32 : i32, i32
  }
}

</mosaic_0001>

<llo_original>
// kernel: tpu_custom_call.1
$region0: #{tpu_custom_call.1}
  #allocation0 [shape = 'u32[]', space=smem, size = 0x4, offset = 0x4, fixed_abs, tag = 'smem constant byte address 0x4 - core index']
  #allocation1 [shape = 'u32[72,128]{1,0:T(1,128)}', space=vmem, size = 0x9000, scoped, tag = 'internal scratch']
  %s0 = inlined_call_operand.vmem [shape: f32[8,32], index: 0, kind: input, shape index: {}]
  %s1 = inlined_call_operand.vmem [shape: f32[32,16], index: 1, kind: input, shape index: {}]
  %s2 = inlined_call_operand.vmem [shape: f32[1,16], index: 2, kind: input, shape index: {}]
  %s3 = inlined_call_operand.hbm [shape: f32[8,16], index: 3, kind: output, shape index: {}]
  %s4 = sld [smem:[#allocation0]]
  $region22: #{tpu_custom_call.1} parent=0
    _
  %s6 = ssub.s32 1, %s4
  %s7 = scalar_select 0, %s6, %s4
  $region1: #{tpu_custom_call.1} parent=0
    #allocation2 [shape = 'u8[4096]{0}', space=vmem, size = 0x1000, scoped, tag = 'output window, operand 0, single buffered']
    #allocation3 [shape = 's32[1]{0}', space=sflag, size = 0x4, scoped, tag = 'scoped memory for tpu_custom_call.1']
    %8 = vsyncpa [#allocation3], 0
    // Predicated region
    $region2: #{tpu_custom_call.1} parent=1 // pred_check
      _
    $region3: #{tpu_custom_call.1} parent=1 // pred_check_branch
      %10 = sbr.rel (0) target = $region5
    $region4: #{tpu_custom_call.1} parent=1 // pred_region
      _
    $region5: #{tpu_custom_call.1} parent=1 // pred_fallthru
      _
    // Predicated region
    $region6: #{tpu_custom_call.1} parent=1 // pred_check
      _
    $region7: #{tpu_custom_call.1} parent=1 // pred_check_branch
      %12 = sbr.rel (0) target = $region9
    $region8: #{tpu_custom_call.1} parent=1 // pred_region
      _
    $region9: #{tpu_custom_call.1} parent=1 // pred_fallthru
      _
    // Predicated region
    $region10: #{tpu_custom_call.1} parent=1 // pred_check
      _
    $region11: #{tpu_custom_call.1} parent=1 // pred_check_branch
      %14 = sbr.rel (0) target = $region13
    $region12: #{tpu_custom_call.1} parent=1 // pred_region
      _
    $region13: #{tpu_custom_call.1} parent=1 // pred_fallthru
      _
    %v15 = vld [vmem:[%s0] sm:$0xff]
    %v16 = vld [vmem:[%s1] sm:$0xff]
    %v17 = vld [vmem:[%s1 + $0x8] sm:$0xff]
    %v18 = vld [vmem:[%s1 + $0x10] sm:$0xff]
    %v19 = vld [vmem:[%s1 + $0x18] sm:$0xff]
    %v20 = vld [vmem:[%s2] sm:$0x1]
    %v22 = vperm.slane %v20, 0
    %vm24 = vcmask 261120
    %v26 = vsel %vm24, %v15, 0
    %28 = vmatpush.msra.mxu0 0.0
    %29 = vmatpush.msra.mxu0 0.0
    %30 = vmatpush.msra.mxu0 0.0
    %31 = vmatpush.msra.mxu0 0.0
    %32 = vmatpush.msra.mxu0 0.0
    %33 = vmatpush.msra.mxu0 0.0
    %34 = vmatpush.msra.mxu0 0.0
    %35 = vmatpush.msra.mxu0 0.0
    %36 = vmatpush.msra.mxu0 0.0
    %37 = vmatpush.msra.mxu0 0.0
    %38 = vmatpush.msra.mxu0 0.0
    %39 = vmatpush.msra.mxu0 0.0
    %40 = vmatpush.msra.mxu0 %v19
    %41 = vmatpush.msra.mxu0 %v18
    %42 = vmatpush.msra.mxu0 %v17
    %43 = vmatpush.msra.mxu0 %v16
    %44 = vmatmul.f32.gmra.mxu0 %v26
    %v45 = vpop.f32.mrf.mxu0
    %v46 = vadd.f32 %v22, %v45
    %47 = vdwg.mxu0
    %vm48 = vcmask 130048
    %v49 = vsel %vm48, %v46, -inf
    %50 = vmax.xlane.f32.xlu0 %v49
    %v51 = vpop.xlane.xlu0 %50
    %v52 = vsub.f32 %v46, %v51
    %v53 = vmul.f32 %v52, 1.442695
    %v54 = vpow.pop %v53
    %v55 = vsel %vm48, %v54, 0.0
    %56 = vadd.xlane.f32.xlu0 %v55
    %v57 = vpop.xlane.xlu0 %56
    %v58 = vrcp.pop %v57
    %v59 = vmul.f32 %v57, %v58
    %v60 = vsub.f32 1.0, %v59
    %v61 = vmul.f32 %v58, %v60
    %v62 = vadd.f32 %v58, %v61
    %vm63 = vweird.f32 %v57
    %vm64 = vweird.f32 %v58
    %vm65 = vmor %vm63, %vm64
    %v66 = vsel %vm65, %v58, %v62
    %v67 = vand.u32 2147483647, %v57
    %vm68 = vcmp.eq.f32.partialorder %v67, 8.507059e+37
    %v69 = vand.u32 %v57, 2147483648
    %v70 = vor.u32 1.1754944e-38, %v69
    %v71 = vsel %vm68, %v70, %v66
    %v72 = vmul.f32 %v71, 16.0
    %v73 = vmul.f32 %v54, %v72
    %74 = vst.msk [vmem:[#allocation2] sm:$0xff] %vm48, %v73
    // Predicated region
    $region14: #{tpu_custom_call.1} parent=1 // pred_check
      _
    $region15: #{tpu_custom_call.1} parent=1 // pred_check_branch
      %76 = sbr.rel (0) target = $region17
    $region16: #{tpu_custom_call.1} parent=1 // pred_region
      %78 = vsyncadd [#allocation3], 0
      %s80 = sshll.u32 [#allocation2], 4
      %s81 = int_to_ptr.vmem [resolvable:$true] %s80
      %s82 = sshll.u32 %s3, 4
      %s83 = int_to_ptr.hbm [resolvable:$true] %s82
      %85 = dma.vmem_to_hbm [thread:$0]  %s81, 128, %s83, [#allocation3]
    $region17: #{tpu_custom_call.1} parent=1 // pred_fallthru
      _
    // Predicated region
    $region18: #{tpu_custom_call.1} parent=1 // pred_check
      _
    $region19: #{tpu_custom_call.1} parent=1 // pred_check_branch
      %87 = sbr.rel (0) target = $region21
    $region20: #{tpu_custom_call.1} parent=1 // pred_region
      %89 = dma.done [#allocation3], 128
    $region21: #{tpu_custom_call.1} parent=1 // pred_fallthru
      _
    %90 = vsyncpa [#allocation3], 1

</llo_original>
